<compile_context>
chip_gen: v7x
topology: tpu7x:2x2x1
jax: 0.10.0
libtpu: 0.0.40
codegen_flags: <defaults>
</compile_context>

<pallas_src>
import functools

import jax
import jax.numpy as jnp
from jax.experimental import pallas as pl
from jax.experimental.pallas import tpu as pltpu


def _patch_embed_kernel(x_ref, w_ref, b_ref, o_ref):
    # x_ref: (TM, K) patch rows; w_ref: (K, E) resident; b_ref: (1, E); o_ref: (TM, E)
    acc = jnp.dot(x_ref[...], w_ref[...], preferred_element_type=jnp.float32)
    o_ref[...] = (acc + b_ref[...]).astype(o_ref.dtype)


def _round_up(v, m):
    return m * ((v + m - 1) // m)


def _pick_tile_m(m, tile_m_max):
    """Row-tile size: one full block when M fits (no masking, no wasted split on
    single-TC chips); otherwise the largest multiple of 8 under the cap, with
    the step count nudged even so v7x's two TensorCores get balanced work."""
    tile_m_max = max(8, int(tile_m_max))
    if m <= tile_m_max:
        return m                                  # block == full dim (always legal)
    cap = max(8, (tile_m_max // 8) * 8)
    steps = pl.cdiv(m, cap)
    if steps > 1 and steps % 2 == 1:
        steps += 1                                # even grid length for v7x megacore
    tm = _round_up(pl.cdiv(m, steps), 8)
    return max(8, min(tm, cap))


def _projection(x_patches, weight_2d, bias_2d, *, tile_m_max=4096,
                out_dtype=jnp.float32):
    """x_patches: (M, K); weight_2d: (K, E); bias_2d: (1, E) -> (M, E)."""
    M, K = x_patches.shape
    E = weight_2d.shape[1]

    tile_m = _pick_tile_m(M, tile_m_max)
    grid_m = pl.cdiv(M, tile_m)                   # ragged last tile handled by Pallas

    # VMEM working set: double-buffered activation + output blocks, resident W/b.
    in_bytes = jnp.dtype(x_patches.dtype).itemsize
    out_bytes = jnp.dtype(out_dtype).itemsize
    vmem_est = (2 * tile_m * K * in_bytes + 2 * tile_m * E * out_bytes
                + 2 * K * E * in_bytes + 2 * E * out_bytes)
    compiler_kwargs = dict(dimension_semantics=("parallel",))
    if vmem_est > 14 * 1024 * 1024:               # only needed past v5e's 16 MiB default
        compiler_kwargs["vmem_limit_bytes"] = int(min(vmem_est * 3 // 2,
                                                      32 * 1024 * 1024))

    return pl.pallas_call(
        _patch_embed_kernel,
        out_shape=jax.ShapeDtypeStruct((M, E), out_dtype),
        grid_spec=pltpu.PrefetchScalarGridSpec(
            num_scalar_prefetch=0,
            grid=(grid_m,),
            in_specs=[
                # K unpadded: block last dim == full array dim, no pad pass.
                pl.BlockSpec((tile_m, K), lambda i: (i, 0)),
                # Grid-invariant blocks stay resident in VMEM across all steps.
                pl.BlockSpec((K, E), lambda i: (0, 0)),
                pl.BlockSpec((1, E), lambda i: (0, 0)),
            ],
            # E unpadded: masked 96-lane store beats a post-kernel slice pass.
            out_specs=pl.BlockSpec((tile_m, E), lambda i: (i, 0)),
        ),
        compiler_params=pltpu.CompilerParams(**compiler_kwargs),
    )(x_patches, weight_2d, bias_2d)


@functools.partial(jax.jit, static_argnames=("patch_size", "tile_m_max", "compute_dtype"))
def patch_embed_3d_forward(x, weight, bias, *, patch_size, tile_m_max=4096,
                           compute_dtype=None):
    """x: (N, C, D, H, W); weight: (E, C, pd, ph, pw); bias: (E,)
    -> (N, D', H', W', E)  (channels-last, as in rearrange('n c d h w -> n d h w c'))."""
    N, C, D, H, W = x.shape
    pd, ph, pw = patch_size
    E = weight.shape[0]

    # Pad each spatial dim up to a multiple of the patch size (F.pad ordering W, H, D).
    pad_w = (-W) % pw
    pad_h = (-H) % ph
    pad_d = (-D) % pd
    if pad_w or pad_h or pad_d:
        x = jnp.pad(x, ((0, 0), (0, 0), (0, pad_d), (0, pad_h), (0, pad_w)))
    Dp, Hp, Wp = (D + pad_d) // pd, (H + pad_h) // ph, (W + pad_w) // pw

    # TODO(synk): this transpose materializes x_flat in HBM (one extra activation
    # pass); see header comment for why the in-kernel fused gather is deferred.
    xp = x.reshape(N, C, Dp, pd, Hp, ph, Wp, pw)
    xp = jnp.transpose(xp, (0, 2, 4, 6, 1, 3, 5, 7))   # (N, Dp, Hp, Wp, C, pd, ph, pw)
    K = C * pd * ph * pw
    M = N * Dp * Hp * Wp
    x_flat = xp.reshape(M, K)

    w2d = jnp.transpose(weight.reshape(E, K))          # (K, E), matches torch reshape(E, -1)
    b2d = bias.reshape(1, E).astype(jnp.float32)

    if compute_dtype is not None:                      # optional, numerics-gated
        x_flat = x_flat.astype(compute_dtype)
        w2d = w2d.astype(compute_dtype)

    out = _projection(x_flat, w2d, b2d, tile_m_max=tile_m_max,
                      out_dtype=jnp.float32)           # (M, E), f32 accumulation

    return out.reshape(N, Dp, Hp, Wp, E)               # free split of leading dim


class PatchEmbed3D:
    """JAX/Pallas port of the PyTorch PatchEmbed3D (norm_layer=None)."""

    def __init__(self, patch_size=(2, 4, 4), in_channels=3, embed_dim=96, key=None):
        self.patch_size = patch_size
        self.in_channels = in_channels
        self.embed_dim = embed_dim
        if key is None:
            key = jax.random.PRNGKey(0)
        k_w, k_b = jax.random.split(key)
        pd, ph, pw = patch_size
        fan_in = in_channels * pd * ph * pw
        bound = 1.0 / float(jnp.sqrt(fan_in))
        # Conv3d weight layout: (embed_dim, in_channels, pd, ph, pw)
        self.weight = jax.random.uniform(
            k_w, (embed_dim, in_channels, pd, ph, pw),
            minval=-bound, maxval=bound, dtype=jnp.float32)
        self.bias = jax.random.uniform(
            k_b, (embed_dim,), minval=-bound, maxval=bound, dtype=jnp.float32)
        # TODO(synk): norm_layer is None in this configuration; LayerNorm branch not implemented.

    def __call__(self, x):
        return patch_embed_3d_forward(
            x, self.weight, self.bias, patch_size=self.patch_size)


def _reference(x, weight, bias, patch_size):
    """Pure-JAX reference via conv_general_dilated for a correctness check."""
    pd, ph, pw = patch_size
    N, C, D, H, W = x.shape
    pad_w = (-W) % pw
    pad_h = (-H) % ph
    pad_d = (-D) % pd
    x = jnp.pad(x, ((0, 0), (0, 0), (0, pad_d), (0, pad_h), (0, pad_w)))
    y = jax.lax.conv_general_dilated(
        x, weight, window_strides=patch_size, padding="VALID",
        dimension_numbers=("NCDHW", "OIDHW", "NCDHW"))
    y = y + bias.reshape(1, -1, 1, 1, 1)
    return jnp.transpose(y, (0, 2, 3, 4, 1))           # n c d h w -> n d h w c


if __name__ == "__main__":
    key = jax.random.PRNGKey(0)
    k_x, k_p, k_x2 = jax.random.split(key, 3)

    module = PatchEmbed3D(patch_size=(2, 4, 4), in_channels=3, embed_dim=96, key=k_p)

    # Test 1: small shapes consistent with the module: N=2, C=3, D=4, H=8, W=8,
    # patch=(2,4,4), embed_dim=96 -> output (2, 2, 2, 2, 96). Single grid step.
    x = jax.random.normal(k_x, (2, 3, 4, 8, 8), dtype=jnp.float32)
    out = jax.block_until_ready(module(x))
    ref = jax.block_until_ready(
        _reference(x, module.weight, module.bias, module.patch_size))
    assert out.shape == (2, 2, 2, 2, 96), out.shape
    assert jnp.allclose(out, ref, atol=1e-4, rtol=1e-4), float(jnp.abs(out - ref).max())

    # Test 2: spatial padding + multi-step grid + ragged last row-tile (M=30, tile=8).
    x2 = jax.random.normal(k_x2, (1, 3, 3, 10, 18), dtype=jnp.float32)
    out2 = jax.block_until_ready(
        patch_embed_3d_forward(x2, module.weight, module.bias,
                               patch_size=module.patch_size, tile_m_max=8))
    ref2 = jax.block_until_ready(
        _reference(x2, module.weight, module.bias, module.patch_size))
    assert out2.shape == (1, 2, 3, 5, 96), out2.shape
    assert jnp.allclose(out2, ref2, atol=1e-4, rtol=1e-4), float(jnp.abs(out2 - ref2).max())

    print("KERNEL_OK")
</pallas_src>

<mosaic_0001>
module attributes {stable_mosaic.version = 11 : i64} {
  func.func @_patch_embed_kernel(%arg0: i32, %arg1: memref<16x96xf32, #tpu.memory_space<vmem>>, %arg2: memref<96x96xf32, #tpu.memory_space<vmem>>, %arg3: memref<1x96xf32, #tpu.memory_space<vmem>>, %arg4: memref<16x96xf32, #tpu.memory_space<vmem>>) attributes {dimension_semantics = [#tpu.dimension_semantics<parallel>], iteration_bounds = array<i64: 1>, scalar_prefetch = 0 : i64, scratch_operands = 0 : i64, tpu.core_type = #tpu.core_type<tc>, window_params = [{transform_indices = @transform_0, window_bounds = array<i64: 16, 96>}, {pipeline_mode = #tpu.pipeline_mode<synchronous>, transform_indices = @transform_1, window_bounds = array<i64: 96, 96>}, {pipeline_mode = #tpu.pipeline_mode<synchronous>, transform_indices = @transform_2, window_bounds = array<i64: 1, 96>}, {transform_indices = @transform_3, window_bounds = array<i64: 16, 96>}]} {
    %c0 = arith.constant 0 : index
    %c0_0 = arith.constant 0 : index
    %0 = vector.load %arg1[%c0, %c0_0] : memref<16x96xf32, #tpu.memory_space<vmem>>, vector<16x96xf32>
    %c0_1 = arith.constant 0 : index
    %c0_2 = arith.constant 0 : index
    %1 = vector.load %arg2[%c0_1, %c0_2] : memref<96x96xf32, #tpu.memory_space<vmem>>, vector<96x96xf32>
    %cst = arith.constant dense<0.000000e+00> : vector<16x96xf32>
    %2 = tpu.matmul %0, %1, %cst {dimension_numbers = #tpu.dot_dimension_numbers<[1], [0], [0], [1], [0, 0, 1, 1], [], []>} : vector<16x96xf32>, vector<96x96xf32>, vector<16x96xf32> -> vector<16x96xf32>
    %c0_3 = arith.constant 0 : index
    %c0_4 = arith.constant 0 : index
    %3 = vector.load %arg3[%c0_3, %c0_4] : memref<1x96xf32, #tpu.memory_space<vmem>>, vector<1x96xf32>
    %4 = vector.broadcast %3 : vector<1x96xf32> to vector<16x96xf32>
    %5 = arith.addf %2, %4 : vector<16x96xf32>
    %c0_5 = arith.constant 0 : index
    %c0_6 = arith.constant 0 : index
    %6 = vector.load %arg4[%c0_5, %c0_6] : memref<16x96xf32, #tpu.memory_space<vmem>>, vector<16x96xf32>
    tpu.vector_store %arg4[%c0_5, %c0_6], %5 {strides = array<i32>} : memref<16x96xf32, #tpu.memory_space<vmem>>, vector<16x96xf32>,
    return
  }
  func.func @transform_0(%arg0: i32) -> (i32, i32) {
    %c0_i32 = arith.constant 0 : i32
    %c0_i32_0 = arith.constant 0 : i32
    return %arg0, %c0_i32 : i32, i32
  }
  func.func @transform_1(%arg0: i32) -> (i32, i32) {
    %c0_i32 = arith.constant 0 : i32
    %c0_i32_0 = arith.constant 0 : i32
    %c0_i32_1 = arith.constant 0 : i32
    return %c0_i32, %c0_i32_0 : i32, i32
  }
  func.func @transform_2(%arg0: i32) -> (i32, i32) {
    %c0_i32 = arith.constant 0 : i32
    %c0_i32_0 = arith.constant 0 : i32
    %c0_i32_1 = arith.constant 0 : i32
    return %c0_i32, %c0_i32_0 : i32, i32
  }
  func.func @transform_3(%arg0: i32) -> (i32, i32) {
    %c0_i32 = arith.constant 0 : i32
    %c0_i32_0 = arith.constant 0 : i32
    return %arg0, %c0_i32 : i32, i32
  }
}

</mosaic_0001>

<llo_original>
// kernel: patch_embed_3d_forward.1
$region0: #{patch_embed_3d_forward.1}
  #allocation0 [shape = 'u32[]', space=smem, size = 0x4, offset = 0x4, fixed_abs, tag = 'smem constant byte address 0x4 - core index']
  #allocation1 [shape = 'u32[144,128]{1,0:T(1,128)}', space=vmem, size = 0x12000, scoped, tag = 'internal scratch']
  %s0 = inlined_call_operand.vmem [shape: f32[16,96], index: 0, kind: input, shape index: {}]
  %s1 = inlined_call_operand.vmem [shape: f32[96,96], index: 1, kind: input, shape index: {}]
  %s2 = inlined_call_operand.vmem [shape: f32[1,96], index: 2, kind: input, shape index: {}]
  %s3 = inlined_call_operand.hbm [shape: f32[16,96], index: 3, kind: output, shape index: {}]
  %s4 = sld [smem:[#allocation0]]
  $region22: #{patch_embed_3d_forward.1} parent=0
    _
  %s6 = ssub.s32 1, %s4
  %s7 = scalar_select 0, %s6, %s4
  $region1: #{patch_embed_3d_forward.1} parent=0
    #allocation2 [shape = 'u8[8192]{0}', space=vmem, size = 0x2000, scoped, tag = 'output window, operand 0, single buffered']
    #allocation3 [shape = 's32[1]{0}', space=sflag, size = 0x4, scoped, tag = 'scoped memory for patch_embed_3d_forward.1']
    %8 = vsyncpa [#allocation3], 0
    // Predicated region
    $region2: #{patch_embed_3d_forward.1} parent=1 // pred_check
      _
    $region3: #{patch_embed_3d_forward.1} parent=1 // pred_check_branch
      %10 = sbr.rel (0) target = $region5
    $region4: #{patch_embed_3d_forward.1} parent=1 // pred_region
      _
    $region5: #{patch_embed_3d_forward.1} parent=1 // pred_fallthru
      _
    // Predicated region
    $region6: #{patch_embed_3d_forward.1} parent=1 // pred_check
      _
    $region7: #{patch_embed_3d_forward.1} parent=1 // pred_check_branch
      %12 = sbr.rel (0) target = $region9
    $region8: #{patch_embed_3d_forward.1} parent=1 // pred_region
      _
    $region9: #{patch_embed_3d_forward.1} parent=1 // pred_fallthru
      _
    // Predicated region
    $region10: #{patch_embed_3d_forward.1} parent=1 // pred_check
      _
    $region11: #{patch_embed_3d_forward.1} parent=1 // pred_check_branch
      %14 = sbr.rel (0) target = $region13
    $region12: #{patch_embed_3d_forward.1} parent=1 // pred_region
      _
    $region13: #{patch_embed_3d_forward.1} parent=1 // pred_fallthru
      _
    %v15 = vld [vmem:[%s0] sm:$0xff]
    %v16 = vld [vmem:[%s0 + $0x8] sm:$0xff]
    %v17 = vld [vmem:[%s1] sm:$0xff]
    %v18 = vld [vmem:[%s1 + $0x8] sm:$0xff]
    %v19 = vld [vmem:[%s1 + $0x10] sm:$0xff]
    %v20 = vld [vmem:[%s1 + $0x18] sm:$0xff]
    %v21 = vld [vmem:[%s1 + $0x20] sm:$0xff]
    %v22 = vld [vmem:[%s1 + $0x28] sm:$0xff]
    %v23 = vld [vmem:[%s1 + $0x30] sm:$0xff]
    %v24 = vld [vmem:[%s1 + $0x38] sm:$0xff]
    %v25 = vld [vmem:[%s1 + $0x40] sm:$0xff]
    %v26 = vld [vmem:[%s1 + $0x48] sm:$0xff]
    %v27 = vld [vmem:[%s1 + $0x50] sm:$0xff]
    %v28 = vld [vmem:[%s1 + $0x58] sm:$0xff]
    %v29 = vld [vmem:[%s2] sm:$0x1]
    %v31 = vlaneseq
    %v32 = vshrl.u32 %v31, 7
    %v33 = vsub.s32 0, %v32
    %v34 = vrot.slane %v29, %v33
    %vm36 = vcmask 785408
    %v38 = vsel %vm36, %v15, 0
    %v41 = vsel %vm36, %v16, 0
    %43 = vmatprep.subr.mxu0 0.0
    %44 = vmatpush1.msra.mxu0 %v17
    %45 = vmatprep.subr.mxu0 0.0
    %46 = vmatpush1.msra.mxu0 %v18
    %47 = vmatprep.subr.mxu0 0.0
    %48 = vmatpush1.msra.mxu0 %v19
    %49 = vmatprep.subr.mxu0 0.0
    %50 = vmatpush1.msra.mxu0 %v20
    %51 = vmatprep.subr.mxu0 0.0
    %52 = vmatpush1.msra.mxu0 %v21
    %53 = vmatprep.subr.mxu0 0.0
    %54 = vmatpush1.msra.mxu0 %v22
    %55 = vmatprep.subr.mxu0 0.0
    %56 = vmatpush1.msra.mxu0 %v23
    %57 = vmatprep.subr.mxu0 0.0
    %58 = vmatpush1.msra.mxu0 %v24
    %59 = vmatprep.subr.mxu0 0.0
    %60 = vmatpush1.msra.mxu0 %v25
    %61 = vmatprep.subr.mxu0 0.0
    %62 = vmatpush1.msra.mxu0 %v26
    %63 = vmatprep.subr.mxu0 0.0
    %64 = vmatpush1.msra.mxu0 %v27
    %65 = vmatprep.subr.mxu0 0.0
    %66 = vmatpush1.msra.mxu0 %v28
    %67 = vmatprep.subr.mxu0 0.0
    %68 = vmatpush1.msra.mxu0 0.0
    %69 = vmatprep.subr.mxu0 0.0
    %70 = vmatpush1.msra.mxu0 0.0
    %71 = vmatprep.subr.mxu0 0.0
    %72 = vmatpush1.msra.mxu0 0.0
    %73 = vmatprep.subr.mxu0 0.0
    %74 = vmatpush1.msra.mxu0 0.0
    %75 = vmatprep.subr.mxu0 0.0
    %76 = vmatpush1.msra.mxu0 0.0
    %77 = vmatprep.subr.mxu0 0.0
    %78 = vmatpush1.msra.mxu0 0.0
    %79 = vmatprep.subr.mxu0 0.0
    %80 = vmatpush1.msra.mxu0 0.0
    %81 = vmatprep.subr.mxu0 0.0
    %82 = vmatpush1.msra.mxu0 0.0
    %83 = vmatprep.subr.mxu0 0.0
    %84 = vmatpush1.msra.mxu0 0.0
    %85 = vmatprep.subr.mxu0 0.0
    %86 = vmatpush1.msra.mxu0 0.0
    %87 = vmatprep.subr.mxu0 0.0
    %88 = vmatpush1.msra.mxu0 0.0
    %89 = vmatprep.subr.mxu0 0.0
    %90 = vmatpush1.msra.mxu0 0.0
    %91 = vmatprep.subr.mxu0 0.0
    %92 = vmatpush1.msra.mxu0 0.0
    %93 = vmatprep.subr.mxu0 0.0
    %94 = vmatpush1.msra.mxu0 0.0
    %95 = vmatprep.subr.mxu0 0.0
    %96 = vmatpush1.msra.mxu0 0.0
    %97 = vmatprep.subr.mxu0 0.0
    %98 = vmatpush1.msra.mxu0 0.0
    %99 = vmatprep.subr.mxu0 0.0
    %100 = vmatpush1.msra.mxu0 0.0
    %101 = vmatprep.subr.mxu0 0.0
    %102 = vmatpush1.msra.mxu0 0.0
    %103 = vmatprep.subr.mxu0 0.0
    %104 = vmatpush1.msra.mxu0 0.0
    %105 = vmatprep.subr.mxu0 0.0
    %106 = vmatpush1.msra.mxu0 0.0
    %107 = vmatprep.mubr.f32.mxu0 0.0
    %108 = vmatmul.mubr.f32.gmra.mrb[0].mxu0 %v38
    %v109 = vpop.f32.mrb[0].mxu0
    %v110 = vadd.f32 %v34, %v109
    %v111 = vpop.f32.mrb[0].mxu0
    %112 = vmatprep.mubr.f32.mxu0 0.0
    %113 = vmatmul.mubr.f32.gmra.mrb[0].mxu0 %v41
    %v114 = vpop.f32.mrb[0].mxu0
    %v115 = vadd.f32 %v34, %v114
    %v116 = vpop.f32.mrb[0].mxu0
    %117 = vdwg.mxu0
    %118 = vst.msk [vmem:[#allocation2] sm:$0xff] %vm36, %v110
    %119 = vst.msk [vmem:[#allocation2 + $0x8] sm:$0xff] %vm36, %v115
    // Predicated region
    $region14: #{patch_embed_3d_forward.1} parent=1 // pred_check
      _
    $region15: #{patch_embed_3d_forward.1} parent=1 // pred_check_branch
      %121 = sbr.rel (0) target = $region17
    $region16: #{patch_embed_3d_forward.1} parent=1 // pred_region
      %s123 = ssub.s32 256, 256
      %124 = vsyncadd [#allocation3], %s123
      %s125 = sshll.u32 [#allocation2], 4
      %s126 = int_to_ptr.vmem [resolvable:$true] %s125
      %131 = dma.vmem_to_hbm [thread:$0]  %s126, 256, %s3, [#allocation3], 128, 128, 8
    $region17: #{patch_embed_3d_forward.1} parent=1 // pred_fallthru
      _
    // Predicated region
    $region18: #{patch_embed_3d_forward.1} parent=1 // pred_check
      _
    $region19: #{patch_embed_3d_forward.1} parent=1 // pred_check_branch
      %133 = sbr.rel (0) target = $region21
    $region20: #{patch_embed_3d_forward.1} parent=1 // pred_region
      %134 = dma.done [#allocation3], 256
    $region21: #{patch_embed_3d_forward.1} parent=1 // pred_fallthru
      _
    %135 = vsyncpa [#allocation3], 1

</llo_original>
